<compile_context>
chip_gen: v5e
topology: v5e:2x2
jax: 0.10.0
libtpu: 0.0.40
codegen_flags: <defaults>
</compile_context>

<pallas_src>
from functools import partial

import jax
import jax.numpy as jnp
from jax.experimental import pallas as pl
from jax.experimental.pallas import tpu as pltpu

_LANES = 128


def _fused_head_kernel(cls_ref, w_ref, b_ref, o_ref, acc_ref):
    # cls_ref: [1, tb, H]   (CLS vectors of one layer, one batch tile)
    # w_ref:   [H, Cpad]    (weight rows for that layer's feature chunk)
    # b_ref:   [1, Cpad]
    # o_ref:   [tb, Cpad]
    # acc_ref: [tb, Cpad] f32 scratch, persists across the layer-reduction axis
    l = pl.program_id(1)

    @pl.when(l == 0)
    def _():
        acc_ref[...] = jnp.zeros_like(acc_ref)

    acc_ref[...] += jnp.dot(
        cls_ref[0], w_ref[...], preferred_element_type=jnp.float32
    )

    @pl.when(l == pl.num_programs(1) - 1)
    def _():
        o_ref[...] = (acc_ref[...] + b_ref[...]).astype(o_ref.dtype)


def prepare_fc_params(weight, bias):
    """One-time param prep: transpose to [K, Cpad] and lane-pad C to 128.

    weight: [C, K] (torch nn.Linear layout), bias: [C].
    Do this at load time, NOT per forward call.
    """
    C, K = weight.shape
    c_pad = max(_LANES, ((C + _LANES - 1) // _LANES) * _LANES)
    w_kc = jnp.zeros((K, c_pad), weight.dtype).at[:, :C].set(weight.T)
    b_row = jnp.zeros((1, c_pad), bias.dtype).at[0, :C].set(bias)
    return w_kc, b_row


def _pick_batch_tile(B):
    for tb in (256, 128):
        if B >= tb and B % tb == 0:
            return tb
    return B  # full-dim block is always layout-legal


@partial(jax.jit, static_argnames=("use_layer_num", "num_classes"))
def bert_concat_header_forward(hidden_states, w_kc, b_row, *, use_layer_num,
                               num_classes):
    """hidden_states: [L, B, S, H]; w_kc: [K, Cpad]; b_row: [1, Cpad]."""
    L, B, S, H = hidden_states.shape
    K, Cp = w_kc.shape
    assert L >= use_layer_num
    assert K == H * use_layer_num

    # Cheap strided slice: only the CLS token of each layer leaves HBM twice
    # (L*B*H elements), the full [L,B,S,H] tensor is never copied.
    cls = hidden_states[:, :, 0, :]  # [L, B, H]

    tb = _pick_batch_tile(B)
    nb = B // tb
    grid = (nb, use_layer_num)  # batch tiles (parallel), layer reduction (last)

    out_padded = pl.pallas_call(
        _fused_head_kernel,
        out_shape=jax.ShapeDtypeStruct((B, Cp), jnp.float32),
        grid_spec=pltpu.PrefetchScalarGridSpec(
            num_scalar_prefetch=0,
            grid=grid,
            in_specs=[
                # Grid step l consumes layer L-1-l (== hidden_states[-(l+1)]),
                # matching the torch concat order; its matching weight rows are
                # chunk l of [K, Cpad].
                pl.BlockSpec((1, tb, H), lambda bi, l: (L - 1 - l, bi, 0)),
                pl.BlockSpec((H, Cp), lambda bi, l: (l, 0)),
                pl.BlockSpec((1, Cp), lambda bi, l: (0, 0)),
            ],
            out_specs=pl.BlockSpec((tb, Cp), lambda bi, l: (bi, 0)),
            scratch_shapes=[pltpu.VMEM((tb, Cp), jnp.float32)],
        ),
        compiler_params=pltpu.CompilerParams(
            dimension_semantics=("parallel", "arbitrary"),
        ),
    )(cls, w_kc, b_row)

    return out_padded[:, :num_classes]


def _reference(hidden_states, weight, bias, use_layer_num):
    cls_tokens = [hidden_states[-i][:, 0, :] for i in range(1, use_layer_num + 1)]
    x = jnp.concatenate(cls_tokens, axis=1)
    return x @ weight.T + bias


if __name__ == "__main__":
    # Small, module-consistent shapes.
    hidden_size = 32
    num_classes = 5
    use_layer_num = 4
    num_layers = 6          # model produces more hidden states than we use
    batch = 2
    seq = 8

    key = jax.random.PRNGKey(0)
    k_hs, k_w, k_b = jax.random.split(key, 3)

    hidden_states = jax.random.normal(
        k_hs, (num_layers, batch, seq, hidden_size), dtype=jnp.float32)

    K = hidden_size * use_layer_num
    # Deterministic "Linear" params (nn.Linear(K, num_classes) shapes).
    bound = 1.0 / (K ** 0.5)
    weight = jax.random.uniform(k_w, (num_classes, K), jnp.float32, -bound, bound)
    bias = jax.random.uniform(k_b, (num_classes,), jnp.float32, -bound, bound)

    # One-time parameter preparation (transpose + lane-pad), outside the forward.
    w_kc, b_row = prepare_fc_params(weight, bias)

    out = bert_concat_header_forward(
        hidden_states, w_kc, b_row,
        use_layer_num=use_layer_num, num_classes=num_classes)
    out = jax.block_until_ready(out)

    ref = _reference(hidden_states, weight, bias, use_layer_num)
    assert out.shape == (batch, num_classes)
    assert jnp.allclose(out, ref, atol=1e-5, rtol=1e-5), "mismatch vs reference"

    print("KERNEL_OK")
</pallas_src>

<mosaic_0001>
module attributes {stable_mosaic.version = 11 : i64} {
  func.func @_fused_head_kernel(%arg0: i32, %arg1: i32, %arg2: memref<1x2x32xf32, #tpu.memory_space<vmem>>, %arg3: memref<32x128xf32, #tpu.memory_space<vmem>>, %arg4: memref<1x128xf32, #tpu.memory_space<vmem>>, %arg5: memref<2x128xf32, #tpu.memory_space<vmem>>, %arg6: memref<2x128xf32, #tpu.memory_space<vmem>>) attributes {dimension_semantics = [#tpu.dimension_semantics<parallel>, #tpu.dimension_semantics<arbitrary>], iteration_bounds = array<i64: 1, 4>, scalar_prefetch = 0 : i64, scratch_operands = 1 : i64, tpu.core_type = #tpu.core_type<tc>, window_params = [{transform_indices = @transform_0, window_bounds = array<i64: 1, 2, 32>}, {transform_indices = @transform_1, window_bounds = array<i64: 32, 128>}, {pipeline_mode = #tpu.pipeline_mode<synchronous>, transform_indices = @transform_2, window_bounds = array<i64: 1, 128>}, {transform_indices = @transform_3, window_bounds = array<i64: 2, 128>}]} {
    %c0_i32 = arith.constant 0 : i32
    %0 = arith.cmpi eq, %arg1, %c0_i32 : i32
    %1 = arith.extui %0 : i1 to i32
    %c0_i32_0 = arith.constant 0 : i32
    %2 = arith.cmpi ne, %1, %c0_i32_0 : i32
    scf.if %2 {
      %cst_10 = arith.constant 0.000000e+00 : f32
      %13 = vector.broadcast %cst_10 : f32 to vector<2x128xf32>
      %c0_11 = arith.constant 0 : index
      %c0_12 = arith.constant 0 : index
      %14 = vector.load %arg6[%c0_11, %c0_12] : memref<2x128xf32, #tpu.memory_space<vmem>>, vector<2x128xf32>
      tpu.vector_store %arg6[%c0_11, %c0_12], %13 {strides = array<i32>} : memref<2x128xf32, #tpu.memory_space<vmem>>, vector<2x128xf32>,
    } else {
    }
    %c0 = arith.constant 0 : index
    %c0_1 = arith.constant 0 : index
    %3 = vector.load %arg6[%c0, %c0_1] : memref<2x128xf32, #tpu.memory_space<vmem>>, vector<2x128xf32>
    %c0_2 = arith.constant 0 : index
    %c0_3 = arith.constant 0 : index
    %c0_4 = arith.constant 0 : index
    %4 = vector.load %arg2[%c0_2, %c0_3, %c0_4] : memref<1x2x32xf32, #tpu.memory_space<vmem>>, vector<1x2x32xf32>
    %5 = vector.shape_cast %4 : vector<1x2x32xf32> to vector<2x32xf32>
    %c0_5 = arith.constant 0 : index
    %c0_6 = arith.constant 0 : index
    %6 = vector.load %arg3[%c0_5, %c0_6] : memref<32x128xf32, #tpu.memory_space<vmem>>, vector<32x128xf32>
    %cst = arith.constant dense<0.000000e+00> : vector<2x128xf32>
    %7 = tpu.matmul %5, %6, %cst {dimension_numbers = #tpu.dot_dimension_numbers<[1], [0], [0], [1], [0, 0, 1, 1], [], []>} : vector<2x32xf32>, vector<32x128xf32>, vector<2x128xf32> -> vector<2x128xf32>
    %8 = arith.addf %3, %7 : vector<2x128xf32>
    %c0_7 = arith.constant 0 : index
    %c0_8 = arith.constant 0 : index
    %9 = vector.load %arg6[%c0_7, %c0_8] : memref<2x128xf32, #tpu.memory_space<vmem>>, vector<2x128xf32>
    tpu.vector_store %arg6[%c0_7, %c0_8], %8 {strides = array<i32>} : memref<2x128xf32, #tpu.memory_space<vmem>>, vector<2x128xf32>,
    %c3_i32 = arith.constant 3 : i32
    %10 = arith.cmpi eq, %arg1, %c3_i32 : i32
    %11 = arith.extui %10 : i1 to i32
    %c0_i32_9 = arith.constant 0 : i32
    %12 = arith.cmpi ne, %11, %c0_i32_9 : i32
    scf.if %12 {
      %c0_10 = arith.constant 0 : index
      %c0_11 = arith.constant 0 : index
      %13 = vector.load %arg6[%c0_10, %c0_11] : memref<2x128xf32, #tpu.memory_space<vmem>>, vector<2x128xf32>
      %c0_12 = arith.constant 0 : index
      %c0_13 = arith.constant 0 : index
      %14 = vector.load %arg4[%c0_12, %c0_13] : memref<1x128xf32, #tpu.memory_space<vmem>>, vector<1x128xf32>
      %15 = vector.broadcast %14 : vector<1x128xf32> to vector<2x128xf32>
      %16 = arith.addf %13, %15 : vector<2x128xf32>
      %c0_14 = arith.constant 0 : index
      %c0_15 = arith.constant 0 : index
      %17 = vector.load %arg5[%c0_14, %c0_15] : memref<2x128xf32, #tpu.memory_space<vmem>>, vector<2x128xf32>
      tpu.vector_store %arg5[%c0_14, %c0_15], %16 {strides = array<i32>} : memref<2x128xf32, #tpu.memory_space<vmem>>, vector<2x128xf32>,
    } else {
    }
    return
  }
  func.func @transform_0(%arg0: i32, %arg1: i32) -> (i32, i32, i32) {
    %c5_i32 = arith.constant 5 : i32
    %0 = arith.subi %c5_i32, %arg1 : i32
    %c0_i32 = arith.constant 0 : i32
    %c0_i32_0 = arith.constant 0 : i32
    return %0, %arg0, %c0_i32 : i32, i32, i32
  }
  func.func @transform_1(%arg0: i32, %arg1: i32) -> (i32, i32) {
    %c0_i32 = arith.constant 0 : i32
    %c0_i32_0 = arith.constant 0 : i32
    return %arg1, %c0_i32 : i32, i32
  }
  func.func @transform_2(%arg0: i32, %arg1: i32) -> (i32, i32) {
    %c0_i32 = arith.constant 0 : i32
    %c0_i32_0 = arith.constant 0 : i32
    %c0_i32_1 = arith.constant 0 : i32
    return %c0_i32, %c0_i32_0 : i32, i32
  }
  func.func @transform_3(%arg0: i32, %arg1: i32) -> (i32, i32) {
    %c0_i32 = arith.constant 0 : i32
    %c0_i32_0 = arith.constant 0 : i32
    return %arg0, %c0_i32 : i32, i32
  }
}

</mosaic_0001>

<llo_original>
// kernel: bert_concat_header_forward.1
$region0: #{bert_concat_header_forward.1}
  #allocation0 [shape = 'u32[]', space=smem, size = 0x4, offset = 0x4, fixed_abs, tag = 'smem constant byte address 0x4 - core index']
  #allocation1 [shape = 'u32[72,128]{1,0:T(1,128)}', space=vmem, size = 0x9000, scoped, tag = 'internal scratch']
  #allocation2 [shape = 'f32[2,128]{1,0:T(2,128)}', space=vmem, size = 0x400, scoped, tag = 'scratch operand']
  %s0 = inlined_call_operand.vmem [shape: f32[6,2,32], index: 0, kind: input, shape index: {}]
  %s1 = inlined_call_operand.hbm [shape: f32[128,128], index: 1, kind: input, shape index: {}]
  %s2 = inlined_call_operand.vmem [shape: f32[1,128], index: 2, kind: input, shape index: {}]
  %s3 = inlined_call_operand.hbm [shape: f32[2,128], index: 3, kind: output, shape index: {}]
  %s4 = sld [smem:[#allocation0]]
  $region57: #{bert_concat_header_forward.1} parent=0
    _
  %s6 = ssub.s32 1, %s4
  %s7 = scalar_select 0, %s6, %s4
  $region1: #{bert_concat_header_forward.1} parent=0
    #allocation3 [shape = 'u8[32768]{0}', space=vmem, size = 0x8000, scoped, tag = 'input window, operand 1']
    #allocation4 [shape = 's32[2]{0}', space=sflag, size = 0x8, scoped, tag = 'scoped memory for bert_concat_header_forward.1']
    #allocation5 [shape = 's32[2]{0}', space=sflag, size = 0x8, scoped, tag = 'scoped memory for bert_concat_header_forward.1']
    #allocation6 [shape = 'u8[1024]{0}', space=vmem, size = 0x400, scoped, tag = 'output window, operand 0, single buffered']
    %8 = vsyncpa [#allocation4], 0
    %s9 = scalar_lea.sflag [#allocation4], 1
    %10 = vsyncpa %s9, 0
    %11 = vsyncpa [#allocation5], 0
    loop: start=0, step=1, limit=6
    $region2: #{bert_concat_header_forward.1} parent=1 // loop_pre_header
      _
    $region3: #{bert_concat_header_forward.1} parent=1 // loop_header
      %s13 = sphi 0, %s17
      %p14 = scmp.ge.s32.totalorder %s13, 6
      %s20 = sphi 0, %s32
      %s21 = sphi 0, %s28
      %s22 = sphi 0, %s20
      %s23 = sphi 0, %s21
      %s24 = sphi 0, %s22
      %s25 = sphi 0, %s23
      %s39 = sphi 0, %s41
      %s42 = sphi 0, %s39
      %s43 = sphi 0, %s42
      %s59 = sphi 0, %s43
      %s65 = sphi 0, %s67
      %s68 = sphi 0, %s65
      %s69 = sphi 0, %s68
      %s85 = sphi 0, %s69
      %s89 = sphi 0, %s89
      %s91 = sphi 0, %s89
      %s92 = sphi 0, %s91
      %s106 = sphi 0, %s92
      %s112 = sphi 0, %s114
      %s115 = sphi 0, %s112
      %s116 = sphi 0, %s115
      %s132 = sphi 0, %s116
    $region4: #{bert_concat_header_forward.1} parent=1 // loop_header_branch
      %16 = sbr.rel (%p14) target = $region8
    $region5: #{bert_concat_header_forward.1} parent=1 // loop_body
      %s18 = ssub.s32 %s13, 1
      %s19 = ssub.s32 %s13, 2
      %s26 = sadd.s32 1, %s21
      %p27 = scmp.ge.s32.totalorder %s26, 4
      %s28 = scalar_select %p27, 0, %s26
      %s29 = sadd.s32 1, %s20
      %s30 = scalar_select %p27, %s29, %s20
      %p31 = scmp.ge.s32.totalorder %s30, 1
      %s32 = scalar_select %p31, 0, %s30
      %s33 = ssub.s32 5, %s21
      %s34 = ssub.s32 5, %s28
      %s35 = ssub.s32 %s33, %s34
      %s36 = ssub.s32 %s20, %s32
      %s37 = sor.u32 %s35, %s36
      %p38 = scmp.eq.s32.totalorder %s37, 0
      %s40 = sadd.s32 %s39, 1
      %s41 = scalar_select %p38, %s39, %s40
      %p44 = pneg %p38
      %p45 = scmp.eq.s32.totalorder %s13, 3
      %p46 = por %p44, %p45
      %p47 = scmp.ne.s32.totalorder %s39, %s42
      %p48 = scmp.eq.s32.totalorder %s13, 0
      %p49 = por %p47, %p48
      %p50 = scmp.ne.s32.totalorder %s39, %s42
      %p51 = scmp.eq.s32.totalorder %s18, 3
      %p52 = por %p50, %p51
      %p53 = scmp.ne.s32.totalorder %s42, %s43
      %p54 = scmp.eq.s32.totalorder %s18, 0
      %p55 = por %p53, %p54
      %p56 = scmp.ne.s32.totalorder %s42, %s43
      %p57 = scmp.eq.s32.totalorder %s19, 3
      %p58 = por %p56, %p57
      %p60 = scmp.ne.s32.totalorder %s43, %s59
      %p61 = scmp.eq.s32.totalorder %s19, 0
      %p62 = por %p60, %p61
      %s63 = ssub.s32 %s21, %s28
      %p64 = scmp.eq.s32.totalorder %s63, 0
      %s66 = sadd.s32 %s65, 1
      %s67 = scalar_select %p64, %s65, %s66
      %p70 = pneg %p64
      %p71 = scmp.eq.s32.totalorder %s13, 3
      %p72 = por %p70, %p71
      %p73 = scmp.ne.s32.totalorder %s65, %s68
      %p74 = scmp.eq.s32.totalorder %s13, 0
      %p75 = por %p73, %p74
      %p76 = scmp.ne.s32.totalorder %s65, %s68
      %p77 = scmp.eq.s32.totalorder %s18, 3
      %p78 = por %p76, %p77
      %p79 = scmp.ne.s32.totalorder %s68, %s69
      %p80 = scmp.eq.s32.totalorder %s18, 0
      %p81 = por %p79, %p80
      %p82 = scmp.ne.s32.totalorder %s68, %s69
      %p83 = scmp.eq.s32.totalorder %s19, 3
      %p84 = por %p82, %p83
      %p86 = scmp.ne.s32.totalorder %s69, %s85
      %p87 = scmp.eq.s32.totalorder %s19, 0
      %p88 = por %p86, %p87
      %s90 = sadd.s32 %s89, 1
      %p93 = scmp.eq.s32.totalorder %s13, 3
      %p94 = scmp.ne.s32.totalorder %s89, %s91
      %p95 = scmp.eq.s32.totalorder %s13, 0
      %p96 = por %p94, %p95
      %p97 = scmp.ne.s32.totalorder %s89, %s91
      %p98 = scmp.eq.s32.totalorder %s18, 3
      %p99 = por %p97, %p98
      %p100 = scmp.ne.s32.totalorder %s91, %s92
      %p101 = scmp.eq.s32.totalorder %s18, 0
      %p102 = por %p100, %p101
      %p103 = scmp.ne.s32.totalorder %s91, %s92
      %p104 = scmp.eq.s32.totalorder %s19, 3
      %p105 = por %p103, %p104
      %p107 = scmp.ne.s32.totalorder %s92, %s106
      %p108 = scmp.eq.s32.totalorder %s19, 0
      %p109 = por %p107, %p108
      %s110 = ssub.s32 %s20, %s32
      %p111 = scmp.eq.s32.totalorder %s110, 0
      %s113 = sadd.s32 %s112, 1
      %s114 = scalar_select %p111, %s112, %s113
      %p117 = pneg %p111
      %p118 = scmp.eq.s32.totalorder %s13, 3
      %p119 = por %p117, %p118
      %p120 = scmp.ne.s32.totalorder %s112, %s115
      %p121 = scmp.eq.s32.totalorder %s13, 0
      %p122 = por %p120, %p121
      %p123 = scmp.ne.s32.totalorder %s112, %s115
      %p124 = scmp.eq.s32.totalorder %s18, 3
      %p125 = por %p123, %p124
      %p126 = scmp.ne.s32.totalorder %s115, %s116
      %p127 = scmp.eq.s32.totalorder %s18, 0
      %p128 = por %p126, %p127
      %p129 = scmp.ne.s32.totalorder %s115, %s116
      %p130 = scmp.eq.s32.totalorder %s19, 3
      %p131 = por %p129, %p130
      %p133 = scmp.ne.s32.totalorder %s116, %s132
      %p134 = scmp.eq.s32.totalorder %s19, 0
      %p135 = por %p133, %p134
      %p136 = scmp.le.s32.totalorder 1, %s13
      %p137 = scmp.lt.s32.totalorder %s13, 5
      %p138 = pnand %p136, %p137
      %p139 = pneg %p138
      // Predicated region
      $region9: #{bert_concat_header_forward.1} parent=5 // pred_check
        _
      $region10: #{bert_concat_header_forward.1} parent=5 // pred_check_branch
        %141 = sbr.rel (%p138) target = $region12
      $region11: #{bert_concat_header_forward.1} parent=5 // pred_region
        %s142 = ssub.s32 %s13, 1
        // Predicated region
        $region13: #{bert_concat_header_forward.1} parent=11 // pred_check
          %p143 = pneg %p102
        $region14: #{bert_concat_header_forward.1} parent=11 // pred_check_branch
          %145 = sbr.rel (%p143) target = $region16
        $region15: #{bert_concat_header_forward.1} parent=11 // pred_region
          _
        $region16: #{bert_concat_header_forward.1} parent=11 // pred_fallthru
          _
      $region12: #{bert_concat_header_forward.1} parent=5 // pred_fallthru
        _
      %p146 = scmp.lt.s32.totalorder %s13, 4
      // Predicated region
      $region17: #{bert_concat_header_forward.1} parent=5 // pred_check
        %p147 = pneg %p146
      $region18: #{bert_concat_header_forward.1} parent=5 // pred_check_branch
        %149 = sbr.rel (%p147) target = $region20
      $region19: #{bert_concat_header_forward.1} parent=5 // pred_region
        // Predicated region
        $region21: #{bert_concat_header_forward.1} parent=19 // pred_check
          %p150 = pneg %p49
        $region22: #{bert_concat_header_forward.1} parent=19 // pred_check_branch
          %152 = sbr.rel (%p150) target = $region24
        $region23: #{bert_concat_header_forward.1} parent=19 // pred_region
          %s153 = ssub.s32 5, %s21
          %p154 = scmp.lt.s32.totalorder %s153, 5
          %s155 = scalar_select %p154, %s153, 5
          %p156 = scmp.lt.s32.totalorder %s20, 0
          %s157 = scalar_select %p156, %s20, 0
          %s158 = sadd.s32 %s157, %s155
          %s159 = smul.addr %s158, 2
          %s160 = scalar_lea.vmem %s0, %s159
          %s161 = ssub.s32 5, %s21
        $region24: #{bert_concat_header_forward.1} parent=19 // pred_fallthru
          _
        // Predicated region
        $region25: #{bert_concat_header_forward.1} parent=19 // pred_check
          %p162 = pneg %p75
        $region26: #{bert_concat_header_forward.1} parent=19 // pred_check_branch
          %164 = sbr.rel (%p162) target = $region28
        $region27: #{bert_concat_header_forward.1} parent=19 // pred_region
          %s165 = sand.u32 %s65, 1
          %s166 = scalar_lea.sflag [#allocation4], %s165
          %s167 = sand.u32 %s65, 1
          %s168 = smul.addr %s167, 32
          %s169 = scalar_lea.vmem [#allocation3], %s168
          %s170 = smul.u32 4, %s21
          %172 = vsyncadd %s166, 0
          %s173 = smul.addr %s170, 8
          %s174 = scalar_lea.hbm %s1, %s173
          %s175 = sshll.u32 %s174, 4
          %s176 = int_to_ptr.hbm [resolvable:$true] %s175
          %s177 = sshll.u32 %s169, 4
          %s178 = int_to_ptr.vmem [resolvable:$true] %s177
          %183 = dma.hbm_to_vmem [thread:$0]  %s176, 512, %s178, %s166, 128, 128, 8
        $region28: #{bert_concat_header_forward.1} parent=19 // pred_fallthru
          _
      $region20: #{bert_concat_header_forward.1} parent=5 // pred_fallthru
        _
      %p184 = scmp.le.s32.totalorder 1, %s13
      %p185 = scmp.lt.s32.totalorder %s13, 5
      %p186 = pnand %p184, %p185
      %p187 = pneg %p186
      // Predicated region
      $region29: #{bert_concat_header_forward.1} parent=5 // pred_check
        _
      $region30: #{bert_concat_header_forward.1} parent=5 // pred_check_branch
        %189 = sbr.rel (%p186) target = $region32
      $region31: #{bert_concat_header_forward.1} parent=5 // pred_region
        %s190 = ssub.s32 %s13, 1
        %s191 = sand.u32 %s68, 1
        %s192 = scalar_lea.sflag [#allocation4], %s191
        %s193 = sand.u32 %s68, 1
        %s194 = smul.addr %s193, 32
        %s195 = scalar_lea.vmem [#allocation3], %s194
        // Predicated region
        $region33: #{bert_concat_header_forward.1} parent=31 // pred_check
          %p196 = pneg %p81
        $region34: #{bert_concat_header_forward.1} parent=31 // pred_check_branch
          %198 = sbr.rel (%p196) target = $region36
        $region35: #{bert_concat_header_forward.1} parent=31 // pred_region
          %200 = dma.done %s192, 512
        $region36: #{bert_concat_header_forward.1} parent=31 // pred_fallthru
          _
        %s201 = ssub.s32 5, %s23
        %p202 = scmp.lt.s32.totalorder %s201, 5
        %s203 = scalar_select %p202, %s201, 5
        %p204 = scmp.lt.s32.totalorder %s22, 0
        %s205 = scalar_select %p204, %s22, 0
        %s206 = sadd.s32 %s205, %s203
        %s207 = smul.addr %s206, 2
        %s208 = scalar_lea.vmem %s0, %s207
        %p209 = pneg %p55
        %p210 = pneg %p52
        %s211 = sand.u32 %s68, 1
        %s212 = scalar_lea.sflag [#allocation4], %s211
        %s213 = sand.u32 %s68, 1
        %s214 = smul.addr %s213, 32
        %s215 = scalar_lea.vmem [#allocation3], %s214
        %p216 = pneg %p81
        %p217 = pneg %p78
        %p218 = pneg %p102
        %p219 = pneg %p99
        %p220 = pneg %p128
        %p221 = pneg %p125
        %s222 = ssub.s32 5, %s23
        %p223 = scmp.lt.s32.totalorder %s222, 5
        %s224 = scalar_select %p223, %s222, 5
        %p225 = scmp.lt.s32.totalorder %s22, 0
        %s226 = scalar_select %p225, %s22, 0
        %s227 = sadd.s32 %s226, %s224
        %s228 = smul.addr %s227, 2
        %s229 = scalar_lea.vmem %s0, %s228
        %s230 = ssub.s32 5, %s23
        %s231 = smul.u32 4, %s23
        %p232 = scmp.eq.s32.totalorder %s23, 0
        // Predicated region
        $region37: #{bert_concat_header_forward.1} parent=31 // pred_check
          %p233 = pneg %p232
        $region38: #{bert_concat_header_forward.1} parent=31 // pred_check_branch
          %235 = sbr.rel (%p233) target = $region40
        $region39: #{bert_concat_header_forward.1} parent=31 // pred_region
          %236 = vst [vmem:[#allocation2] sm:$0x3] 0.0
        $region40: #{bert_concat_header_forward.1} parent=31 // pred_fallthru
          _
        %v237 = vld [vmem:[#allocation2] sm:$0x3]
        %v238 = vld [vmem:[%s229] sm:$0x3]
        %v239 = vld [vmem:[%s195] sm:$0xff]
        %v240 = vld [vmem:[%s195 + $0x8] sm:$0xff]
        %v241 = vld [vmem:[%s195 + $0x10] sm:$0xff]
        %v242 = vld [vmem:[%s195 + $0x18] sm:$0xff]
        %vm243 = vcmask 261120
        %v245 = vsel %vm243, %v238, 0
        %247 = vmatpush.msra.mxu0 0.0
        %248 = vmatpush.msra.mxu0 0.0
        %249 = vmatpush.msra.mxu0 0.0
        %250 = vmatpush.msra.mxu0 0.0
        %251 = vmatpush.msra.mxu0 0.0
        %252 = vmatpush.msra.mxu0 0.0
        %253 = vmatpush.msra.mxu0 0.0
        %254 = vmatpush.msra.mxu0 0.0
        %255 = vmatpush.msra.mxu0 0.0
        %256 = vmatpush.msra.mxu0 0.0
        %257 = vmatpush.msra.mxu0 0.0
        %258 = vmatpush.msra.mxu0 0.0
        %259 = vmatpush.msra.mxu0 %v242
        %260 = vmatpush.msra.mxu0 %v241
        %261 = vmatpush.msra.mxu0 %v240
        %262 = vmatpush.msra.mxu0 %v239
        %263 = vmatmul.f32.gmra.mxu0 %v245
        %v264 = vpop.f32.mrf.mxu0
        %v265 = vadd.f32 0.0, %v264
        %266 = vdwg.mxu0
        %v267 = vadd.f32 %v237, %v265
        %268 = vst [vmem:[#allocation2] sm:$0x3] %v267
        %p269 = scmp.eq.s32.totalorder %s23, 3
        // Predicated region
        $region41: #{bert_concat_header_forward.1} parent=31 // pred_check
          %p270 = pneg %p269
        $region42: #{bert_concat_header_forward.1} parent=31 // pred_check_branch
          %272 = sbr.rel (%p270) target = $region44
        $region43: #{bert_concat_header_forward.1} parent=31 // pred_region
          %v273 = vld [vmem:[#allocation2] sm:$0x3]
          %v274 = vld [vmem:[%s2] sm:$0x1]
          %v276 = vperm.slane %v274, 0
          %v278 = vadd.f32 %v273, %v276
          %279 = vst [vmem:[#allocation6] sm:$0x3] %v278
        $region44: #{bert_concat_header_forward.1} parent=31 // pred_fallthru
          _
        // Predicated region
        $region45: #{bert_concat_header_forward.1} parent=31 // pred_check
          %p280 = pneg %p125
        $region46: #{bert_concat_header_forward.1} parent=31 // pred_check_branch
          %282 = sbr.rel (%p280) target = $region48
        $region47: #{bert_concat_header_forward.1} parent=31 // pred_region
          %284 = vsyncadd [#allocation5], 0
          %s285 = smul.addr %s22, 2
          %s286 = scalar_lea.hbm %s3, %s285
          %s288 = sshll.u32 [#allocation6], 4
          %s289 = int_to_ptr.vmem [resolvable:$true] %s288
          %s290 = sshll.u32 %s286, 4
          %s291 = int_to_ptr.hbm [resolvable:$true] %s290
          %293 = dma.vmem_to_hbm [thread:$0]  %s289, 32, %s291, [#allocation5]
        $region48: #{bert_concat_header_forward.1} parent=31 // pred_fallthru
          _
        // Predicated region
        $region49: #{bert_concat_header_forward.1} parent=31 // pred_check
          %p294 = pneg %p125
        $region50: #{bert_concat_header_forward.1} parent=31 // pred_check_branch
          %296 = sbr.rel (%p294) target = $region52
        $region51: #{bert_concat_header_forward.1} parent=31 // pred_region
          %298 = dma.done [#allocation5], 32
        $region52: #{bert_concat_header_forward.1} parent=31 // pred_fallthru
          _
      $region32: #{bert_concat_header_forward.1} parent=5 // pred_fallthru
        _
      %p299 = scmp.le.s32.totalorder 2, %s13
      // Predicated region
      $region53: #{bert_concat_header_forward.1} parent=5 // pred_check
        %p300 = pneg %p299
      $region54: #{bert_concat_header_forward.1} parent=5 // pred_check_branch
        %302 = sbr.rel (%p300) target = $region56
      $region55: #{bert_concat_header_forward.1} parent=5 // pred_region
        %s303 = ssub.s32 %s13, 2
      $region56: #{bert_concat_header_forward.1} parent=5 // pred_fallthru
        _
    $region6: #{bert_concat_header_forward.1} parent=1 // loop_footer
      %s17 = sadd.s32 1, %s13
    $region7: #{bert_concat_header_forward.1} parent=1 // loop_footer_branch
      %12 = sbr.rel target = $region3
    $region8: #{bert_concat_header_forward.1} parent=1 // loop_exit
      _
    %304 = vsyncpa [#allocation4], 1
    %s305 = scalar_lea.sflag [#allocation4], 1
    %306 = vsyncpa %s305, 1
    %307 = vsyncpa [#allocation5], 1
    %s308 = scalar_lea.sflag [#allocation5], 1
    %309 = vsyncpa %s308, 1

</llo_original>
